<compile_context>
chip_gen: v7x
topology: tpu7x:2x2x1
jax: 0.10.0
libtpu: 0.0.40
codegen_flags: <defaults>
</compile_context>

<pallas_src>
import functools

import jax
import jax.numpy as jnp
from jax.experimental import pallas as pl
from jax.experimental.pallas import tpu as pltpu

HID_SIZE = 128


def _round_up(x, m):
    return ((x + m - 1) // m) * m


def _actor_kernel(x_ref, w1_ref, b1_ref, w2_ref, b2_ref, mut_ref):
    """One batch tile; batch lives on the lane axis of the compute/outputs.

    x_ref  : (TB, obs)  input tile, native layout, f32
    w1_ref : (HID, obs) PyTorch-layout weight 1 (compute dtype)
    b1_ref : (HID, 1)   bias 1 (f32)
    w2_ref : (act, HID) PyTorch-layout weight 2 (compute dtype)
    b2_ref : (act, 1)   bias 2 (f32)
    mut_ref: (act, TB)  mu tile, transposed -> lane-dense stores (f32)
    """
    xc = x_ref[...].astype(w1_ref.dtype)                 # in-vreg cast, no HBM pass

    # h^T = tanh(W1 @ x^T + b1): contract the obs axis of both operands
    # ([HID, obs] x [TB, obs] -> [HID, TB]); f32 accumulation on the MXU.
    ht = jnp.tanh(
        jax.lax.dot_general(
            w1_ref[...], xc,
            dimension_numbers=(((1,), (1,)), ((), ())),
            preferred_element_type=jnp.float32,
        )
        + b1_ref[...]
    )

    # mu^T = tanh(W2 @ h^T + b2): [act, HID] @ [HID, TB] -> [act, TB].
    mut = jnp.tanh(
        jnp.dot(w2_ref[...], ht.astype(w2_ref.dtype),
                preferred_element_type=jnp.float32)
        + b2_ref[...]
    )
    mut_ref[...] = mut.astype(mut_ref.dtype)


@functools.partial(jax.jit, static_argnames=("tile_b", "compute_dtype"))
def actor_forward(x, w1, b1, w2, b2, log_std, *,
                  tile_b=4096, compute_dtype=jnp.bfloat16):
    """Returns (mu, std), each [B, act_size] f32 (the Normal's parameters).

    Weights use native PyTorch layout: w1 [HID, obs], w2 [act, HID].
    """
    B, obs_size = x.shape
    hid_size, obs_w = w1.shape
    act_size = w2.shape[0]
    assert obs_w == obs_size and w2.shape[1] == hid_size

    # Lane-aligned batch tile; pad the batch to an exact multiple of it.
    tb = max(128, min(_round_up(tile_b, 128), _round_up(B, 128)))
    b_pad = _round_up(B, tb)
    xp = x if b_pad == B else jnp.pad(x, ((0, b_pad - B), (0, 0)))

    w1c = w1.astype(compute_dtype)                        # (HID, obs)
    w2c = w2.astype(compute_dtype)                        # (act, HID)
    b1c = b1.reshape(hid_size, 1).astype(jnp.float32)
    b2c = b2.reshape(act_size, 1).astype(jnp.float32)

    grid_spec = pltpu.PrefetchScalarGridSpec(
        num_scalar_prefetch=0,
        grid=(b_pad // tb,),
        in_specs=[
            # x tile marches along the batch axis (contiguous HBM reads).
            pl.BlockSpec((tb, obs_size), lambda i: (i, 0)),
            # Weights / biases: constant index_map -> VMEM-resident across grid.
            pl.BlockSpec((hid_size, obs_size), lambda i: (0, 0)),
            pl.BlockSpec((hid_size, 1), lambda i: (0, 0)),
            pl.BlockSpec((act_size, hid_size), lambda i: (0, 0)),
            pl.BlockSpec((act_size, 1), lambda i: (0, 0)),
        ],
        # Transposed output: act on sublanes, batch on lanes -> lane-dense vst.
        out_specs=pl.BlockSpec((act_size, tb), lambda i: (0, i)),
    )

    mu_t = pl.pallas_call(
        _actor_kernel,
        out_shape=jax.ShapeDtypeStruct((act_size, b_pad), jnp.float32),
        grid_spec=grid_spec,
        compiler_params=pltpu.CompilerParams(
            # Batch tiles are independent -> megacore-shardable on v7x.
            dimension_semantics=("parallel",),
            # Per-step working set is a few MiB; explicit, generation-safe cap.
            vmem_limit_bytes=32 * 1024 * 1024,
        ),
    )(xp, w1c, b1c, w2c, b2c)

    mu = mu_t[:, :B].T                                    # back to (B, act)
    # std = exp(log_std) broadcast over the batch: formed lazily here instead
    # of writing B identical rows from the kernel.
    std = jnp.broadcast_to(jnp.exp(log_std).astype(mu.dtype), mu.shape)
    return mu, std


def init_actor_params(key, obs_size, act_size):
    """Deterministic init mirroring nn.Linear's default U(-1/sqrt(fan_in), ...).

    Weights are in PyTorch layout: w1 [HID, obs], w2 [act, HID].
    """
    k1, k2, k3, k4 = jax.random.split(key, 4)
    lim1 = 1.0 / jnp.sqrt(obs_size)
    lim2 = 1.0 / jnp.sqrt(HID_SIZE)
    w1 = jax.random.uniform(k1, (HID_SIZE, obs_size), jnp.float32, -lim1, lim1)
    b1 = jax.random.uniform(k2, (HID_SIZE,), jnp.float32, -lim1, lim1)
    w2 = jax.random.uniform(k3, (act_size, HID_SIZE), jnp.float32, -lim2, lim2)
    b2 = jax.random.uniform(k4, (act_size,), jnp.float32, -lim2, lim2)
    log_std = jnp.zeros((act_size,), jnp.float32)  # nn.Parameter(torch.zeros(act_size))
    return w1, b1, w2, b2, log_std


if __name__ == "__main__":
    key = jax.random.PRNGKey(0)
    kx, kp = jax.random.split(key)

    batch, obs_size, act_size = 64, 32, 8
    x = jax.random.normal(kx, (batch, obs_size), jnp.float32)
    w1, b1, w2, b2, log_std = init_actor_params(kp, obs_size, act_size)

    # Default (bf16 compute) path.
    mu, std = actor_forward(x, w1, b1, w2, b2, log_std)
    jax.block_until_ready((mu, std))

    # f32 compute path (tight-tolerance correctness check of the kernel math).
    mu32, std32 = actor_forward(x, w1, b1, w2, b2, log_std,
                                compute_dtype=jnp.float32)
    jax.block_until_ready((mu32, std32))

    # Pure-JAX reference (PyTorch semantics: x @ W.T + b).
    h_ref = jnp.tanh(x @ w1.T + b1)
    mu_ref = jnp.tanh(h_ref @ w2.T + b2)
    std_ref = jnp.broadcast_to(jnp.exp(log_std), mu_ref.shape)

    assert mu.shape == (batch, act_size) and std.shape == (batch, act_size)
    assert jnp.allclose(mu32, mu_ref, atol=1e-5), "mu mismatch (f32 path)"
    assert jnp.allclose(mu, mu_ref, atol=1e-2), "mu mismatch (bf16 path)"
    assert jnp.allclose(std, std_ref, atol=1e-6), "std mismatch"

    # TODO(synk): torch.distributions.Normal object itself has no Pallas
    # equivalent; the kernel/wrapper returns its (mu, std) parameters.
    print("KERNEL_OK")
</pallas_src>

<mosaic_0001>
module attributes {stable_mosaic.version = 11 : i64} {
  func.func @_actor_kernel(%arg0: i32, %arg1: memref<128x32xf32, #tpu.memory_space<vmem>>, %arg2: memref<128x32xbf16, #tpu.memory_space<vmem>>, %arg3: memref<128x1xf32, #tpu.memory_space<vmem>>, %arg4: memref<8x128xbf16, #tpu.memory_space<vmem>>, %arg5: memref<8x1xf32, #tpu.memory_space<vmem>>, %arg6: memref<8x128xf32, #tpu.memory_space<vmem>>) attributes {dimension_semantics = [#tpu.dimension_semantics<parallel>], iteration_bounds = array<i64: 1>, scalar_prefetch = 0 : i64, scratch_operands = 0 : i64, tpu.core_type = #tpu.core_type<tc>, window_params = [{transform_indices = @transform_0, window_bounds = array<i64: 128, 32>}, {pipeline_mode = #tpu.pipeline_mode<synchronous>, transform_indices = @transform_1, window_bounds = array<i64: 128, 32>}, {pipeline_mode = #tpu.pipeline_mode<synchronous>, transform_indices = @transform_2, window_bounds = array<i64: 128, 1>}, {pipeline_mode = #tpu.pipeline_mode<synchronous>, transform_indices = @transform_3, window_bounds = array<i64: 8, 128>}, {pipeline_mode = #tpu.pipeline_mode<synchronous>, transform_indices = @transform_4, window_bounds = array<i64: 8, 1>}, {transform_indices = @transform_5, window_bounds = array<i64: 8, 128>}]} {
    %c0 = arith.constant 0 : index
    %c0_0 = arith.constant 0 : index
    %0 = vector.load %arg1[%c0, %c0_0] : memref<128x32xf32, #tpu.memory_space<vmem>>, vector<128x32xf32>
    %1 = arith.truncf %0 : vector<128x32xf32> to vector<128x32xbf16>
    %c0_1 = arith.constant 0 : index
    %c0_2 = arith.constant 0 : index
    %2 = vector.load %arg2[%c0_1, %c0_2] : memref<128x32xbf16, #tpu.memory_space<vmem>>, vector<128x32xbf16>
    %cst = arith.constant dense<0.000000e+00> : vector<128x128xf32>
    %3 = tpu.matmul %2, %1, %cst {dimension_numbers = #tpu.dot_dimension_numbers<[1], [1], [0], [0], [0, 0, 1, 0], [], []>} : vector<128x32xbf16>, vector<128x32xbf16>, vector<128x128xf32> -> vector<128x128xf32>
    %c0_3 = arith.constant 0 : index
    %c0_4 = arith.constant 0 : index
    %4 = vector.load %arg3[%c0_3, %c0_4] : memref<128x1xf32, #tpu.memory_space<vmem>>, vector<128x1xf32>
    %5 = vector.broadcast %4 : vector<128x1xf32> to vector<128x128xf32>
    %6 = arith.addf %3, %5 : vector<128x128xf32>
    %7 = math.tanh %6 : vector<128x128xf32>
    %c0_5 = arith.constant 0 : index
    %c0_6 = arith.constant 0 : index
    %8 = vector.load %arg4[%c0_5, %c0_6] : memref<8x128xbf16, #tpu.memory_space<vmem>>, vector<8x128xbf16>
    %9 = arith.truncf %7 : vector<128x128xf32> to vector<128x128xbf16>
    %cst_7 = arith.constant dense<0.000000e+00> : vector<8x128xf32>
    %10 = tpu.matmul %8, %9, %cst_7 {dimension_numbers = #tpu.dot_dimension_numbers<[1], [0], [0], [1], [0, 0, 1, 1], [], []>} : vector<8x128xbf16>, vector<128x128xbf16>, vector<8x128xf32> -> vector<8x128xf32>
    %c0_8 = arith.constant 0 : index
    %c0_9 = arith.constant 0 : index
    %11 = vector.load %arg5[%c0_8, %c0_9] : memref<8x1xf32, #tpu.memory_space<vmem>>, vector<8x1xf32>
    %12 = vector.broadcast %11 : vector<8x1xf32> to vector<8x128xf32>
    %13 = arith.addf %10, %12 : vector<8x128xf32>
    %14 = math.tanh %13 : vector<8x128xf32>
    %c0_10 = arith.constant 0 : index
    %c0_11 = arith.constant 0 : index
    %15 = vector.load %arg6[%c0_10, %c0_11] : memref<8x128xf32, #tpu.memory_space<vmem>>, vector<8x128xf32>
    tpu.vector_store %arg6[%c0_10, %c0_11], %14 {strides = array<i32>} : memref<8x128xf32, #tpu.memory_space<vmem>>, vector<8x128xf32>,
    return
  }
  func.func @transform_0(%arg0: i32) -> (i32, i32) {
    %c0_i32 = arith.constant 0 : i32
    %c0_i32_0 = arith.constant 0 : i32
    return %arg0, %c0_i32 : i32, i32
  }
  func.func @transform_1(%arg0: i32) -> (i32, i32) {
    %c0_i32 = arith.constant 0 : i32
    %c0_i32_0 = arith.constant 0 : i32
    %c0_i32_1 = arith.constant 0 : i32
    return %c0_i32, %c0_i32_0 : i32, i32
  }
  func.func @transform_2(%arg0: i32) -> (i32, i32) {
    %c0_i32 = arith.constant 0 : i32
    %c0_i32_0 = arith.constant 0 : i32
    %c0_i32_1 = arith.constant 0 : i32
    return %c0_i32, %c0_i32_0 : i32, i32
  }
  func.func @transform_3(%arg0: i32) -> (i32, i32) {
    %c0_i32 = arith.constant 0 : i32
    %c0_i32_0 = arith.constant 0 : i32
    %c0_i32_1 = arith.constant 0 : i32
    return %c0_i32, %c0_i32_0 : i32, i32
  }
  func.func @transform_4(%arg0: i32) -> (i32, i32) {
    %c0_i32 = arith.constant 0 : i32
    %c0_i32_0 = arith.constant 0 : i32
    %c0_i32_1 = arith.constant 0 : i32
    return %c0_i32, %c0_i32_0 : i32, i32
  }
  func.func @transform_5(%arg0: i32) -> (i32, i32) {
    %c0_i32 = arith.constant 0 : i32
    %c0_i32_0 = arith.constant 0 : i32
    return %c0_i32, %arg0 : i32, i32
  }
}

</mosaic_0001>

<llo_original>
// kernel: actor_forward.1
$region0: #{actor_forward.1}
  #allocation0 [shape = 'u32[]', space=smem, size = 0x4, offset = 0x4, fixed_abs, tag = 'smem constant byte address 0x4 - core index']
  #allocation1 [shape = 'u32[144,128]{1,0:T(1,128)}', space=vmem, size = 0x12000, scoped, tag = 'internal scratch']
  %s0 = inlined_call_operand.vmem [shape: f32[128,32], index: 0, kind: input, shape index: {}]
  %s1 = inlined_call_operand.vmem [shape: bf16[128,32], index: 1, kind: input, shape index: {}]
  %s2 = inlined_call_operand.vmem [shape: f32[128,1], index: 2, kind: input, shape index: {}]
  %s3 = inlined_call_operand.vmem [shape: bf16[8,128], index: 3, kind: input, shape index: {}]
  %s4 = inlined_call_operand.vmem [shape: f32[8,1], index: 4, kind: input, shape index: {}]
  %s5 = inlined_call_operand.vmem [shape: f32[8,128], index: 5, kind: output, shape index: {}]
  %s6 = sld [smem:[#allocation0]]
  $region30: #{actor_forward.1} parent=0
    _
  %s8 = ssub.s32 1, %s6
  %s9 = scalar_select 0, %s8, %s6
  // Predicated region
  $region2: #{actor_forward.1} parent=0 // pred_check
    _
  $region3: #{actor_forward.1} parent=0 // pred_check_branch
    %11 = sbr.rel (0) target = $region5
  $region4: #{actor_forward.1} parent=0 // pred_region
    _
  $region5: #{actor_forward.1} parent=0 // pred_fallthru
    _
  // Predicated region
  $region6: #{actor_forward.1} parent=0 // pred_check
    _
  $region7: #{actor_forward.1} parent=0 // pred_check_branch
    %13 = sbr.rel (0) target = $region9
  $region8: #{actor_forward.1} parent=0 // pred_region
    _
  $region9: #{actor_forward.1} parent=0 // pred_fallthru
    _
  // Predicated region
  $region10: #{actor_forward.1} parent=0 // pred_check
    _
  $region11: #{actor_forward.1} parent=0 // pred_check_branch
    %15 = sbr.rel (0) target = $region13
  $region12: #{actor_forward.1} parent=0 // pred_region
    _
  $region13: #{actor_forward.1} parent=0 // pred_fallthru
    _
  // Predicated region
  $region14: #{actor_forward.1} parent=0 // pred_check
    _
  $region15: #{actor_forward.1} parent=0 // pred_check_branch
    %17 = sbr.rel (0) target = $region17
  $region16: #{actor_forward.1} parent=0 // pred_region
    _
  $region17: #{actor_forward.1} parent=0 // pred_fallthru
    _
  // Predicated region
  $region18: #{actor_forward.1} parent=0 // pred_check
    _
  $region19: #{actor_forward.1} parent=0 // pred_check_branch
    %19 = sbr.rel (0) target = $region21
  $region20: #{actor_forward.1} parent=0 // pred_region
    _
  $region21: #{actor_forward.1} parent=0 // pred_fallthru
    _
  %v21 = vld [vmem:[%s0] sm:$0xff]
  %v22 = vld [vmem:[%s0 + $0x8] sm:$0xff]
  %v23 = vld [vmem:[%s0 + $0x10] sm:$0xff]
  %v24 = vld [vmem:[%s0 + $0x18] sm:$0xff]
  %v25 = vld [vmem:[%s0 + $0x20] sm:$0xff]
  %v26 = vld [vmem:[%s0 + $0x28] sm:$0xff]
  %v27 = vld [vmem:[%s0 + $0x30] sm:$0xff]
  %v28 = vld [vmem:[%s0 + $0x38] sm:$0xff]
  %v29 = vld [vmem:[%s0 + $0x40] sm:$0xff]
  %v30 = vld [vmem:[%s0 + $0x48] sm:$0xff]
  %v31 = vld [vmem:[%s0 + $0x50] sm:$0xff]
  %v32 = vld [vmem:[%s0 + $0x58] sm:$0xff]
  %v33 = vld [vmem:[%s0 + $0x60] sm:$0xff]
  %v34 = vld [vmem:[%s0 + $0x68] sm:$0xff]
  %v35 = vld [vmem:[%s0 + $0x70] sm:$0xff]
  %v36 = vld [vmem:[%s0 + $0x78] sm:$0xff]
  %v37 = vpack.c.bf16 %v22, %v21
  %v38 = vpack.c.bf16 %v24, %v23
  %v39 = vpack.c.bf16 %v26, %v25
  %v40 = vpack.c.bf16 %v28, %v27
  %v41 = vpack.c.bf16 %v30, %v29
  %v42 = vpack.c.bf16 %v32, %v31
  %v43 = vpack.c.bf16 %v34, %v33
  %v44 = vpack.c.bf16 %v36, %v35
  %v45 = vld [vmem:[%s1] sm:$0xf]
  %v46 = vld [vmem:[%s1 + $0x4] sm:$0xf]
  %v47 = vld [vmem:[%s1 + $0x8] sm:$0xf]
  %v48 = vld [vmem:[%s1 + $0xc] sm:$0xf]
  %v49 = vld [vmem:[%s1 + $0x10] sm:$0xf]
  %v50 = vld [vmem:[%s1 + $0x14] sm:$0xf]
  %v51 = vld [vmem:[%s1 + $0x18] sm:$0xf]
  %v52 = vld [vmem:[%s1 + $0x1c] sm:$0xf]
  %v53 = vld [vmem:[%s1 + $0x20] sm:$0xf]
  %v54 = vld [vmem:[%s1 + $0x24] sm:$0xf]
  %v55 = vld [vmem:[%s1 + $0x28] sm:$0xf]
  %v56 = vld [vmem:[%s1 + $0x2c] sm:$0xf]
  %v57 = vld [vmem:[%s1 + $0x30] sm:$0xf]
  %v58 = vld [vmem:[%s1 + $0x34] sm:$0xf]
  %v59 = vld [vmem:[%s1 + $0x38] sm:$0xf]
  %v60 = vld [vmem:[%s1 + $0x3c] sm:$0xf]
  %v61 = vld [vmem:[%s2] sm:$0xff]
  %v62 = vld [vmem:[%s2 + $0x8] sm:$0xff]
  %v63 = vld [vmem:[%s2 + $0x10] sm:$0xff]
  %v64 = vld [vmem:[%s2 + $0x18] sm:$0xff]
  %v65 = vld [vmem:[%s2 + $0x20] sm:$0xff]
  %v66 = vld [vmem:[%s2 + $0x28] sm:$0xff]
  %v67 = vld [vmem:[%s2 + $0x30] sm:$0xff]
  %v68 = vld [vmem:[%s2 + $0x38] sm:$0xff]
  %v69 = vld [vmem:[%s2 + $0x40] sm:$0xff]
  %v70 = vld [vmem:[%s2 + $0x48] sm:$0xff]
  %v71 = vld [vmem:[%s2 + $0x50] sm:$0xff]
  %v72 = vld [vmem:[%s2 + $0x58] sm:$0xff]
  %v73 = vld [vmem:[%s2 + $0x60] sm:$0xff]
  %v74 = vld [vmem:[%s2 + $0x68] sm:$0xff]
  %v75 = vld [vmem:[%s2 + $0x70] sm:$0xff]
  %v76 = vld [vmem:[%s2 + $0x78] sm:$0xff]
  %78 = vset.pattern.permute.xlu0 0
  %79 = vperm.xlu0 %78, %v61
  %v80 = vpop.permute.xlu0 %79
  %83 = vset.pattern.permute.xlu0 0
  %84 = vperm.xlu0 %83, %v62
  %v85 = vpop.permute.xlu0 %84
  %88 = vset.pattern.permute.xlu0 0
  %89 = vperm.xlu0 %88, %v63
  %v90 = vpop.permute.xlu0 %89
  %93 = vset.pattern.permute.xlu0 0
  %94 = vperm.xlu0 %93, %v64
  %v95 = vpop.permute.xlu0 %94
  %98 = vset.pattern.permute.xlu0 0
  %99 = vperm.xlu0 %98, %v65
  %v100 = vpop.permute.xlu0 %99
  %103 = vset.pattern.permute.xlu0 0
  %104 = vperm.xlu0 %103, %v66
  %v105 = vpop.permute.xlu0 %104
  %108 = vset.pattern.permute.xlu0 0
  %109 = vperm.xlu0 %108, %v67
  %v110 = vpop.permute.xlu0 %109
  %113 = vset.pattern.permute.xlu0 0
  %114 = vperm.xlu0 %113, %v68
  %v115 = vpop.permute.xlu0 %114
  %118 = vset.pattern.permute.xlu0 0
  %119 = vperm.xlu0 %118, %v69
  %v120 = vpop.permute.xlu0 %119
  %123 = vset.pattern.permute.xlu0 0
  %124 = vperm.xlu0 %123, %v70
  %v125 = vpop.permute.xlu0 %124
  %128 = vset.pattern.permute.xlu0 0
  %129 = vperm.xlu0 %128, %v71
  %v130 = vpop.permute.xlu0 %129
  %133 = vset.pattern.permute.xlu0 0
  %134 = vperm.xlu0 %133, %v72
  %v135 = vpop.permute.xlu0 %134
  %138 = vset.pattern.permute.xlu0 0
  %139 = vperm.xlu0 %138, %v73
  %v140 = vpop.permute.xlu0 %139
  %143 = vset.pattern.permute.xlu0 0
  %144 = vperm.xlu0 %143, %v74
  %v145 = vpop.permute.xlu0 %144
  %148 = vset.pattern.permute.xlu0 0
  %149 = vperm.xlu0 %148, %v75
  %v150 = vpop.permute.xlu0 %149
  %153 = vset.pattern.permute.xlu0 0
  %154 = vperm.xlu0 %153, %v76
  %v155 = vpop.permute.xlu0 %154
  %v173 = vunpack.c.l.b16 %v45
  %v174 = vunpack.c.l.b16 %v46
  %v175 = vunpack.c.l.b16 %v47
  %v176 = vunpack.c.l.b16 %v48
  %v177 = vunpack.c.l.b16 %v49
  %v178 = vunpack.c.l.b16 %v50
  %v179 = vunpack.c.l.b16 %v51
  %v180 = vunpack.c.l.b16 %v52
  %v181 = vunpack.c.l.b16 %v53
  %v182 = vunpack.c.l.b16 %v54
  %v183 = vunpack.c.l.b16 %v55
  %v184 = vunpack.c.l.b16 %v56
  %v185 = vunpack.c.l.b16 %v57
  %v186 = vunpack.c.l.b16 %v58
  %v187 = vunpack.c.l.b16 %v59
  %v188 = vunpack.c.l.b16 %v60
  %v189 = vpack.c.b16 %v174, %v173
  %v190 = vpack.c.b16 %v176, %v175
  %v191 = vpack.c.b16 %v178, %v177
  %v192 = vpack.c.b16 %v180, %v179
  %v193 = vpack.c.b16 %v182, %v181
  %v194 = vpack.c.b16 %v184, %v183
  %v195 = vpack.c.b16 %v186, %v185
  %v196 = vpack.c.b16 %v188, %v187
  %vm197 = vcmask 261120
  %v199 = vsel %vm197, %v189, 0
  %v202 = vsel %vm197, %v190, 0
  %v205 = vsel %vm197, %v191, 0
  %v208 = vsel %vm197, %v192, 0
  %v211 = vsel %vm197, %v193, 0
  %v214 = vsel %vm197, %v194, 0
  %v217 = vsel %vm197, %v195, 0
  %v220 = vsel %vm197, %v196, 0
  %v223 = vsel %vm197, %v37, 0
  %v226 = vsel %vm197, %v38, 0
  %v229 = vsel %vm197, %v39, 0
  %v232 = vsel %vm197, %v40, 0
  %v235 = vsel %vm197, %v41, 0
  %v238 = vsel %vm197, %v42, 0
  %v241 = vsel %vm197, %v43, 0
  %v244 = vsel %vm197, %v44, 0
  %246 = vmatprep.subr.bf16.mxu0 0
  %247 = vmatpush1.bf16.xpose.msra.mxu0 %v223
  %248 = vmatprep.subr.bf16.mxu0 0
  %249 = vmatpush1.bf16.xpose.msra.mxu0 %v226
  %250 = vmatprep.subr.bf16.mxu0 0
  %251 = vmatpush1.bf16.xpose.msra.mxu0 %v229
  %252 = vmatprep.subr.bf16.mxu0 0
  %253 = vmatpush1.bf16.xpose.msra.mxu0 %v232
  %254 = vmatprep.subr.bf16.mxu0 0
  %255 = vmatpush1.bf16.xpose.msra.mxu0 %v235
  %256 = vmatprep.subr.bf16.mxu0 0
  %257 = vmatpush1.bf16.xpose.msra.mxu0 %v238
  %258 = vmatprep.subr.bf16.mxu0 0
  %259 = vmatpush1.bf16.xpose.msra.mxu0 %v241
  %260 = vmatprep.subr.bf16.mxu0 0
  %261 = vmatpush1.bf16.xpose.msra.mxu0 %v244
  %262 = vmatprep.subr.bf16.mxu0 0
  %263 = vmatpush1.bf16.xpose.msra.mxu0 0
  %264 = vmatprep.subr.bf16.mxu0 0
  %265 = vmatpush1.bf16.xpose.msra.mxu0 0
  %266 = vmatprep.subr.bf16.mxu0 0
  %267 = vmatpush1.bf16.xpose.msra.mxu0 0
  %268 = vmatprep.subr.bf16.mxu0 0
  %269 = vmatpush1.bf16.xpose.msra.mxu0 0
  %270 = vmatprep.subr.bf16.mxu0 0
  %271 = vmatpush1.bf16.xpose.msra.mxu0 0
  %272 = vmatprep.subr.bf16.mxu0 0
  %273 = vmatpush1.bf16.xpose.msra.mxu0 0
  %274 = vmatprep.subr.bf16.mxu0 0
  %275 = vmatpush1.bf16.xpose.msra.mxu0 0
  %276 = vmatprep.subr.bf16.mxu0 0
  %277 = vmatpush1.bf16.xpose.msra.mxu0 0
  %278 = vmatprep.mubr.bf16.mxu0 0
  %279 = vmatmul.mubr.bf16.gmra.mrb[0].mxu0 %v199
  %v280 = vpop.f32.mrb[0].mxu0
  %v281 = vadd.f32 %v80, %v280
  %v282 = vpop.f32.mrb[0].mxu0
  %v283 = vpop.f32.mrb[0].mxu0
  %v284 = vadd.f32 %v85, %v283
  %v285 = vpop.f32.mrb[0].mxu0
  %286 = vmatprep.mubr.bf16.mxu0 0
  %287 = vmatmul.mubr.bf16.gmra.mrb[0].mxu0 %v202
  %v288 = vpop.f32.mrb[0].mxu0
  %v289 = vadd.f32 %v90, %v288
  %v290 = vpop.f32.mrb[0].mxu0
  %v291 = vpop.f32.mrb[0].mxu0
  %v292 = vadd.f32 %v95, %v291
  %v293 = vpop.f32.mrb[0].mxu0
  %294 = vmatprep.mubr.bf16.mxu0 0
  %295 = vmatmul.mubr.bf16.gmra.mrb[0].mxu0 %v205
  %v296 = vpop.f32.mrb[0].mxu0
  %v297 = vadd.f32 %v100, %v296
  %v298 = vpop.f32.mrb[0].mxu0
  %v299 = vpop.f32.mrb[0].mxu0
  %v300 = vadd.f32 %v105, %v299
  %v301 = vpop.f32.mrb[0].mxu0
  %302 = vmatprep.mubr.bf16.mxu0 0
  %303 = vmatmul.mubr.bf16.gmra.mrb[0].mxu0 %v208
  %v304 = vpop.f32.mrb[0].mxu0
  %v305 = vadd.f32 %v110, %v304
  %v306 = vpop.f32.mrb[0].mxu0
  %v307 = vpop.f32.mrb[0].mxu0
  %v308 = vadd.f32 %v115, %v307
  %v309 = vpop.f32.mrb[0].mxu0
  %310 = vmatprep.mubr.bf16.mxu0 0
  %311 = vmatmul.mubr.bf16.gmra.mrb[0].mxu0 %v211
  %v312 = vpop.f32.mrb[0].mxu0
  %v313 = vadd.f32 %v120, %v312
  %v314 = vpop.f32.mrb[0].mxu0
  %v315 = vpop.f32.mrb[0].mxu0
  %v316 = vadd.f32 %v125, %v315
  %v317 = vpop.f32.mrb[0].mxu0
  %318 = vmatprep.mubr.bf16.mxu0 0
  %319 = vmatmul.mubr.bf16.gmra.mrb[0].mxu0 %v214
  %v320 = vpop.f32.mrb[0].mxu0
  %v321 = vadd.f32 %v130, %v320
  %v322 = vpop.f32.mrb[0].mxu0
  %v323 = vpop.f32.mrb[0].mxu0
  %v324 = vadd.f32 %v135, %v323
  %v325 = vpop.f32.mrb[0].mxu0
  %326 = vmatprep.mubr.bf16.mxu0 0
  %327 = vmatmul.mubr.bf16.gmra.mrb[0].mxu0 %v217
  %v328 = vpop.f32.mrb[0].mxu0
  %v329 = vadd.f32 %v140, %v328
  %v330 = vpop.f32.mrb[0].mxu0
  %v331 = vpop.f32.mrb[0].mxu0
  %v332 = vadd.f32 %v145, %v331
  %v333 = vpop.f32.mrb[0].mxu0
  %334 = vmatprep.mubr.bf16.mxu0 0
  %335 = vmatmul.mubr.bf16.gmra.mrb[0].mxu0 %v220
  %v336 = vpop.f32.mrb[0].mxu0
  %v337 = vadd.f32 %v150, %v336
  %v338 = vpop.f32.mrb[0].mxu0
  %v339 = vpop.f32.mrb[0].mxu0
  %v340 = vadd.f32 %v155, %v339
  %v341 = vpop.f32.mrb[0].mxu0
  %342 = vdwg.mxu0
  %v343 = vtanh.pop %v281
  %v344 = vtanh.pop %v284
  %v345 = vtanh.pop %v289
  %v346 = vtanh.pop %v292
  %v347 = vtanh.pop %v297
  %v348 = vtanh.pop %v300
  %v349 = vtanh.pop %v305
  %v350 = vtanh.pop %v308
  %v351 = vtanh.pop %v313
  %v352 = vtanh.pop %v316
  %v353 = vtanh.pop %v321
  %v354 = vtanh.pop %v324
  %v355 = vtanh.pop %v329
  %v356 = vtanh.pop %v332
  %v357 = vtanh.pop %v337
  %v358 = vtanh.pop %v340
  %v359 = vld [vmem:[%s3] sm:$0xf]
  %v360 = vpack.c.bf16 %v344, %v343
  %v361 = vpack.c.bf16 %v346, %v345
  %v362 = vpack.c.bf16 %v348, %v347
  %v363 = vpack.c.bf16 %v350, %v349
  %v364 = vpack.c.bf16 %v352, %v351
  %v365 = vpack.c.bf16 %v354, %v353
  %v366 = vpack.c.bf16 %v356, %v355
  %v367 = vpack.c.bf16 %v358, %v357
  %v368 = vld [vmem:[%s4] sm:$0xff]
  %370 = vset.pattern.permute.xlu0 0
  %371 = vperm.xlu0 %370, %v368
  %v372 = vpop.permute.xlu0 %371
  %374 = vmatprep.subr.bf16.mxu0 0
  %375 = vmatpush1.bf16.msra.mxu0 %v360
  %376 = vmatprep.subr.bf16.mxu0 0
  %377 = vmatpush1.bf16.msra.mxu0 %v361
  %378 = vmatprep.subr.bf16.mxu0 0
  %379 = vmatpush1.bf16.msra.mxu0 %v362
  %380 = vmatprep.subr.bf16.mxu0 0
  %381 = vmatpush1.bf16.msra.mxu0 %v363
  %382 = vmatprep.subr.bf16.mxu0 0
  %383 = vmatpush1.bf16.msra.mxu0 %v364
  %384 = vmatprep.subr.bf16.mxu0 0
  %385 = vmatpush1.bf16.msra.mxu0 %v365
  %386 = vmatprep.subr.bf16.mxu0 0
  %387 = vmatpush1.bf16.msra.mxu0 %v366
  %388 = vmatprep.subr.bf16.mxu0 0
  %389 = vmatpush1.bf16.msra.mxu0 %v367
  %390 = vmatprep.subr.bf16.mxu0 0
  %391 = vmatpush1.bf16.msra.mxu0 0
  %392 = vmatprep.subr.bf16.mxu0 0
  %393 = vmatpush1.bf16.msra.mxu0 0
  %394 = vmatprep.subr.bf16.mxu0 0
  %395 = vmatpush1.bf16.msra.mxu0 0
  %396 = vmatprep.subr.bf16.mxu0 0
  %397 = vmatpush1.bf16.msra.mxu0 0
  %398 = vmatprep.subr.bf16.mxu0 0
  %399 = vmatpush1.bf16.msra.mxu0 0
  %400 = vmatprep.subr.bf16.mxu0 0
  %401 = vmatpush1.bf16.msra.mxu0 0
  %402 = vmatprep.subr.bf16.mxu0 0
  %403 = vmatpush1.bf16.msra.mxu0 0
  %404 = vmatprep.subr.bf16.mxu0 0
  %405 = vmatpush1.bf16.msra.mxu0 0
  %406 = vmatprep.mubr.bf16.mxu0 0
  %407 = vmatmul.mubr.bf16.gmra.mrb[0].mxu0 %v359
  %v408 = vpop.f32.mrb[0].mxu0
  %v409 = vadd.f32 %v372, %v408
  %v410 = vpop.f32.mrb[0].mxu0
  %v411 = vpop.f32.mrb[0].mxu0
  %v412 = vpop.f32.mrb[0].mxu0
  %413 = vdwg.mxu0
  %v414 = vtanh.pop %v409
  %415 = vst [vmem:[%s5] sm:$0xff] %v414
  // Predicated region
  $region22: #{actor_forward.1} parent=0 // pred_check
    _
  $region23: #{actor_forward.1} parent=0 // pred_check_branch
    %417 = sbr.rel (0) target = $region25
  $region24: #{actor_forward.1} parent=0 // pred_region
    _
  $region25: #{actor_forward.1} parent=0 // pred_fallthru
    _
  // Predicated region
  $region26: #{actor_forward.1} parent=0 // pred_check
    _
  $region27: #{actor_forward.1} parent=0 // pred_check_branch
    %419 = sbr.rel (0) target = $region29
  $region28: #{actor_forward.1} parent=0 // pred_region
    _
  $region29: #{actor_forward.1} parent=0 // pred_fallthru
    _

</llo_original>
